<compile_context>
chip_gen: v7x
topology: tpu7x:2x2x1
jax: 0.10.0
libtpu: 0.0.40
codegen_flags: <defaults>
</compile_context>

<pallas_src>
import jax
import jax.numpy as jnp
from jax import lax
from jax.experimental import pallas as pl
from jax.experimental.pallas import tpu as pltpu

_LANE = 128  # TPU lane width; the final output feature dim is padded to this.


def _gcn_encoder_kernel(adj_ref, x_ref, eye_ref, w1_ref, b1_ref, w2_ref, b2_ref,
                        out_ref):
    # Per-grid-step view: a block of Bblk graphs.
    #   adj_ref: (Bblk, N, N)   x_ref: (Bblk, N, F_in)   out_ref: (Bblk, N, n_out)
    # Weights / eye are shared across the grid.
    bblk, n, _ = x_ref.shape

    a = adj_ref[...].astype(jnp.float32)                       # (Bblk, N, N)

    # add_loop=True: force diagonal to exactly 1 (regardless of original diag values).
    a = jnp.where(eye_ref[...][None] > jnp.float32(0.0), jnp.float32(1.0), a)

    # deg_inv_sqrt = clamp(rowsum(adj), min=1) ** -0.5          -> (Bblk, N, 1)
    deg = jnp.sum(a, axis=-1, keepdims=True)
    dinv = lax.rsqrt(jnp.maximum(deg, jnp.float32(1.0)))

    def dense_gcn_conv(h, w_ref, b_ref):
        # out = D^-1/2 A D^-1/2 (h W) + b, rewritten without transposes:
        #     = dinv * (A @ (dinv * (h @ W))) + b
        # The feature projection is fused across the graph block (M = Bblk*N) to fill
        # the MXU rows and reuse the stationary weight tile.
        f_out = w_ref.shape[-1]
        hw = jnp.dot(h.reshape(bblk * n, h.shape[-1]), w_ref[...],
                     preferred_element_type=jnp.float32).reshape(bblk, n, f_out)
        hw = dinv * hw
        ah = jnp.einsum('bij,bjf->bif', a, hw,
                        preferred_element_type=jnp.float32)
        return dinv * ah + b_ref[...]

    # block 1: dropout (identity at inference) -> conv -> ReLU
    h = dense_gcn_conv(x_ref[...].astype(jnp.float32), w1_ref, b1_ref)
    h = jnp.maximum(h, jnp.float32(0.0))

    # block 2: dropout (identity at inference) -> conv -> Identity
    # w2/b2 are zero-padded to a full 128-lane output, so this store is lane-dense.
    out_ref[...] = dense_gcn_conv(h, w2_ref, b2_ref)


def prepare_gcn_encoder_params(w1, b1, w2, b2, n_nodes):
    """One-time parameter prep (hoisted out of the per-call hot path):
    pad the second-layer output to a full 128-lane slab and build the eye mask."""
    f_hid, dim_emb = w2.shape
    n_out = max(_LANE, ((dim_emb + _LANE - 1) // _LANE) * _LANE)
    w2p = jnp.zeros((f_hid, n_out), jnp.float32).at[:, :dim_emb].set(w2)
    b2p = jnp.zeros((1, n_out), jnp.float32).at[:, :dim_emb].set(
        jnp.asarray(b2, jnp.float32).reshape(1, -1))
    return {
        "eye": jnp.eye(n_nodes, dtype=jnp.float32),
        "w1": jnp.asarray(w1, jnp.float32),
        "b1": jnp.asarray(b1, jnp.float32).reshape(1, -1),
        "w2p": w2p,
        "b2p": b2p,
        "dim_emb": int(dim_emb),  # python int (used only for the final slice)
    }


def _pick_block_batch(batch, max_graphs_per_step=8):
    """Largest divisor of `batch` (capped) that still leaves >= 2 grid steps, so the
    batch axis can be sharded across the two TensorCores on v7x."""
    best = 1
    for d in range(1, min(batch, max_graphs_per_step) + 1):
        if batch % d == 0 and (batch // d >= 2 or batch == 1):
            best = d
    return best


def gcn_encoder_ginn(x, adj, params):
    """Batched GINN GCN encoder.

    x:   (B, N, dim_input) float32
    adj: (B, N, N)         float32
    params: output of prepare_gcn_encoder_params(...)
    returns (B, N, dim_emb) float32
    """
    B, N, f_in = x.shape
    f_hid = params["w1"].shape[1]
    n_out = params["w2p"].shape[1]
    dim_emb = params["dim_emb"]

    bblk = _pick_block_batch(B)
    grid = (B // bblk,)

    flops = 2 * B * (N * f_in * f_hid + N * N * f_hid
                     + N * f_hid * n_out + N * N * n_out)
    bytes_accessed = 4 * (B * (N * N + N * f_in + N * n_out)
                          + f_in * f_hid + f_hid * n_out + N * N + f_hid + n_out)
    cost = pl.CostEstimate(flops=flops, transcendentals=B * N,
                           bytes_accessed=bytes_accessed)

    out = pl.pallas_call(
        _gcn_encoder_kernel,
        out_shape=jax.ShapeDtypeStruct((B, N, n_out), jnp.float32),
        grid=grid,
        in_specs=[
            pl.BlockSpec((bblk, N, N), lambda b: (b, 0, 0)),      # adj block
            pl.BlockSpec((bblk, N, f_in), lambda b: (b, 0, 0)),   # x block
            pl.BlockSpec((N, N), lambda b: (0, 0)),               # eye (shared)
            pl.BlockSpec((f_in, f_hid), lambda b: (0, 0)),        # w1
            pl.BlockSpec((1, f_hid), lambda b: (0, 0)),           # b1
            pl.BlockSpec((f_hid, n_out), lambda b: (0, 0)),       # w2 (lane-padded)
            pl.BlockSpec((1, n_out), lambda b: (0, 0)),           # b2 (lane-padded)
        ],
        out_specs=pl.BlockSpec((bblk, N, n_out), lambda b: (b, 0, 0)),
        compiler_params=pltpu.CompilerParams(
            dimension_semantics=("parallel",)),                   # 2 TCs on v7x
        cost_estimate=cost,
    )(adj, x, params["eye"], params["w1"], params["b1"],
      params["w2p"], params["b2p"])

    return out[:, :, :dim_emb]


def _glorot(key, shape):
    fan_in, fan_out = shape
    limit = jnp.sqrt(6.0 / (fan_in + fan_out))
    return jax.random.uniform(key, shape, jnp.float32, -limit, limit)


def _reference_single(x, adj, w1, b1, w2, b2):
    """Pure-JAX reference mirroring the PyTorch forward (eval mode), one graph."""
    n = adj.shape[0]
    a = adj.at[jnp.arange(n), jnp.arange(n)].set(1.0)
    d = jnp.maximum(a.sum(-1), 1.0) ** -0.5
    a_norm = d[:, None] * a * d[None, :]

    h = a_norm @ (x @ w1) + b1[0]     # conv1
    h = jnp.maximum(h, 0.0)           # ReLU
    z = a_norm @ (h @ w2) + b2[0]     # conv2 (Identity activation)
    return z


if __name__ == "__main__":
    # Small, forward-consistent shapes; a small batch of graphs per call.
    B = 4             # graphs per call -> grid=(2,) with 2 graphs per step
    N = 32            # nodes per graph
    dim_input = 20
    dim_emb = 8
    dim_hidden = int(round(0.8 * dim_input))  # 16

    key = jax.random.PRNGKey(0)
    kx, ka, kw1, kw2 = jax.random.split(key, 4)

    x = jax.random.normal(kx, (B, N, dim_input), jnp.float32)
    adj = (jax.random.uniform(ka, (B, N, N)) > 0.7).astype(jnp.float32)

    # Deterministic parameter init (glorot weights, zero bias), as in DenseGCNConv.
    w1 = _glorot(kw1, (dim_input, dim_hidden))
    b1 = jnp.zeros((1, dim_hidden), jnp.float32)
    w2 = _glorot(kw2, (dim_hidden, dim_emb))
    b2 = jnp.zeros((1, dim_emb), jnp.float32)

    # TODO(synk): nn.Dropout is stochastic and training-only; the kernel implements
    # the deterministic eval-mode forward (dropout == identity).

    params = prepare_gcn_encoder_params(w1, b1, w2, b2, N)  # one-time, off hot path

    out = gcn_encoder_ginn(x, adj, params)
    out = jax.block_until_ready(out)

    ref = jax.vmap(lambda xi, ai: _reference_single(xi, ai, w1, b1, w2, b2))(x, adj)
    assert out.shape == (B, N, dim_emb)
    assert jnp.allclose(out, ref, atol=1e-4, rtol=1e-4)

    print("KERNEL_OK")
</pallas_src>

<mosaic_0001>
module attributes {stable_mosaic.version = 11 : i64} {
  func.func @_gcn_encoder_kernel(%arg0: i32, %arg1: memref<2x32x32xf32, #tpu.memory_space<vmem>>, %arg2: memref<2x32x20xf32, #tpu.memory_space<vmem>>, %arg3: memref<32x32xf32, #tpu.memory_space<vmem>>, %arg4: memref<20x16xf32, #tpu.memory_space<vmem>>, %arg5: memref<1x16xf32, #tpu.memory_space<vmem>>, %arg6: memref<16x128xf32, #tpu.memory_space<vmem>>, %arg7: memref<1x128xf32, #tpu.memory_space<vmem>>, %arg8: memref<2x32x128xf32, #tpu.memory_space<vmem>>) attributes {dimension_semantics = [#tpu.dimension_semantics<parallel>], iteration_bounds = array<i64: 2>, scalar_prefetch = 0 : i64, scratch_operands = 0 : i64, tpu.core_type = #tpu.core_type<tc>, window_params = [{transform_indices = @transform_0, window_bounds = array<i64: 2, 32, 32>}, {transform_indices = @transform_1, window_bounds = array<i64: 2, 32, 20>}, {pipeline_mode = #tpu.pipeline_mode<synchronous>, transform_indices = @transform_2, window_bounds = array<i64: 32, 32>}, {pipeline_mode = #tpu.pipeline_mode<synchronous>, transform_indices = @transform_3, window_bounds = array<i64: 20, 16>}, {pipeline_mode = #tpu.pipeline_mode<synchronous>, transform_indices = @transform_4, window_bounds = array<i64: 1, 16>}, {pipeline_mode = #tpu.pipeline_mode<synchronous>, transform_indices = @transform_5, window_bounds = array<i64: 16, 128>}, {pipeline_mode = #tpu.pipeline_mode<synchronous>, transform_indices = @transform_6, window_bounds = array<i64: 1, 128>}, {transform_indices = @transform_7, window_bounds = array<i64: 2, 32, 128>}]} {
    %c0 = arith.constant 0 : index
    %c0_0 = arith.constant 0 : index
    %c0_1 = arith.constant 0 : index
    %0 = vector.load %arg1[%c0, %c0_0, %c0_1] : memref<2x32x32xf32, #tpu.memory_space<vmem>>, vector<2x32x32xf32>
    %c0_2 = arith.constant 0 : index
    %c0_3 = arith.constant 0 : index
    %1 = vector.load %arg3[%c0_2, %c0_3] : memref<32x32xf32, #tpu.memory_space<vmem>>, vector<32x32xf32>
    %2 = vector.shape_cast %1 : vector<32x32xf32> to vector<1x32x32xf32>
    %cst = arith.constant 0.000000e+00 : f32
    %3 = vector.broadcast %cst : f32 to vector<1x32x32xf32>
    %4 = arith.cmpf ogt, %2, %3 : vector<1x32x32xf32>
    %cst_4 = arith.constant 1.000000e+00 : f32
    %5 = vector.shape_cast %4 : vector<1x32x32xi1> to vector<1x32x32xi1>
    %6 = vector.broadcast %5 : vector<1x32x32xi1> to vector<2x32x32xi1>
    %7 = vector.broadcast %cst_4 : f32 to vector<2x32x32xf32>
    %8 = arith.select %6, %7, %0 : vector<2x32x32xi1>, vector<2x32x32xf32>
    %cst_5 = arith.constant dense<0.000000e+00> : vector<2x32xf32>
    %9 = vector.multi_reduction <add>, %8, %cst_5 [2] : vector<2x32x32xf32> to vector<2x32xf32>
    %10 = vector.shape_cast %9 : vector<2x32xf32> to vector<2x32x1xf32>
    %cst_6 = arith.constant 1.000000e+00 : f32
    %11 = vector.broadcast %cst_6 : f32 to vector<2x32x1xf32>
    %12 = arith.maximumf %10, %11 : vector<2x32x1xf32>
    %13 = math.rsqrt %12 : vector<2x32x1xf32>
    %c0_7 = arith.constant 0 : index
    %c0_8 = arith.constant 0 : index
    %c0_9 = arith.constant 0 : index
    %14 = vector.load %arg2[%c0_7, %c0_8, %c0_9] : memref<2x32x20xf32, #tpu.memory_space<vmem>>, vector<2x32x20xf32>
    %15 = vector.shape_cast %14 : vector<2x32x20xf32> to vector<64x20xf32>
    %c0_10 = arith.constant 0 : index
    %c0_11 = arith.constant 0 : index
    %16 = vector.load %arg4[%c0_10, %c0_11] : memref<20x16xf32, #tpu.memory_space<vmem>>, vector<20x16xf32>
    %cst_12 = arith.constant dense<0.000000e+00> : vector<64x16xf32>
    %17 = tpu.matmul %15, %16, %cst_12 {dimension_numbers = #tpu.dot_dimension_numbers<[1], [0], [0], [1], [0, 0, 1, 1], [], []>} : vector<64x20xf32>, vector<20x16xf32>, vector<64x16xf32> -> vector<64x16xf32>
    %18 = vector.shape_cast %17 : vector<64x16xf32> to vector<2x32x16xf32>
    %19 = vector.broadcast %13 : vector<2x32x1xf32> to vector<2x32x16xf32>
    %20 = arith.mulf %19, %18 : vector<2x32x16xf32>
    "tpu.trace_start"() <{level = 10 : i32, message = "bij,bjf->bif"}> : () -> ()
    %cst_13 = arith.constant dense<0.000000e+00> : vector<2x32x16xf32>
    %21 = tpu.matmul %8, %20, %cst_13 {dimension_numbers = #tpu.dot_dimension_numbers<[2], [1], [1], [2], [0, 0, 0, 1, 1, 2], [0], [0]>} : vector<2x32x32xf32>, vector<2x32x16xf32>, vector<2x32x16xf32> -> vector<2x32x16xf32>
    "tpu.trace_stop"() : () -> ()
    %22 = vector.broadcast %13 : vector<2x32x1xf32> to vector<2x32x16xf32>
    %23 = arith.mulf %22, %21 : vector<2x32x16xf32>
    %c0_14 = arith.constant 0 : index
    %c0_15 = arith.constant 0 : index
    %24 = vector.load %arg5[%c0_14, %c0_15] : memref<1x16xf32, #tpu.memory_space<vmem>>, vector<1x16xf32>
    %25 = vector.shape_cast %24 : vector<1x16xf32> to vector<1x1x16xf32>
    %26 = vector.broadcast %25 : vector<1x1x16xf32> to vector<2x32x16xf32>
    %27 = arith.addf %23, %26 : vector<2x32x16xf32>
    %cst_16 = arith.constant 0.000000e+00 : f32
    %28 = vector.broadcast %cst_16 : f32 to vector<2x32x16xf32>
    %29 = arith.maximumf %27, %28 : vector<2x32x16xf32>
    %30 = vector.shape_cast %29 : vector<2x32x16xf32> to vector<64x16xf32>
    %c0_17 = arith.constant 0 : index
    %c0_18 = arith.constant 0 : index
    %31 = vector.load %arg6[%c0_17, %c0_18] : memref<16x128xf32, #tpu.memory_space<vmem>>, vector<16x128xf32>
    %cst_19 = arith.constant dense<0.000000e+00> : vector<64x128xf32>
    %32 = tpu.matmul %30, %31, %cst_19 {dimension_numbers = #tpu.dot_dimension_numbers<[1], [0], [0], [1], [0, 0, 1, 1], [], []>} : vector<64x16xf32>, vector<16x128xf32>, vector<64x128xf32> -> vector<64x128xf32>
    %33 = vector.shape_cast %32 : vector<64x128xf32> to vector<2x32x128xf32>
    %34 = vector.broadcast %13 : vector<2x32x1xf32> to vector<2x32x128xf32>
    %35 = arith.mulf %34, %33 : vector<2x32x128xf32>
    "tpu.trace_start"() <{level = 10 : i32, message = "bij,bjf->bif"}> : () -> ()
    %cst_20 = arith.constant dense<0.000000e+00> : vector<2x32x128xf32>
    %36 = tpu.matmul %8, %35, %cst_20 {dimension_numbers = #tpu.dot_dimension_numbers<[2], [1], [1], [2], [0, 0, 0, 1, 1, 2], [0], [0]>} : vector<2x32x32xf32>, vector<2x32x128xf32>, vector<2x32x128xf32> -> vector<2x32x128xf32>
    "tpu.trace_stop"() : () -> ()
    %37 = vector.broadcast %13 : vector<2x32x1xf32> to vector<2x32x128xf32>
    %38 = arith.mulf %37, %36 : vector<2x32x128xf32>
    %c0_21 = arith.constant 0 : index
    %c0_22 = arith.constant 0 : index
    %39 = vector.load %arg7[%c0_21, %c0_22] : memref<1x128xf32, #tpu.memory_space<vmem>>, vector<1x128xf32>
    %40 = vector.shape_cast %39 : vector<1x128xf32> to vector<1x1x128xf32>
    %41 = vector.broadcast %40 : vector<1x1x128xf32> to vector<2x32x128xf32>
    %42 = arith.addf %38, %41 : vector<2x32x128xf32>
    %c0_23 = arith.constant 0 : index
    %c0_24 = arith.constant 0 : index
    %c0_25 = arith.constant 0 : index
    %43 = vector.load %arg8[%c0_23, %c0_24, %c0_25] : memref<2x32x128xf32, #tpu.memory_space<vmem>>, vector<2x32x128xf32>
    tpu.vector_store %arg8[%c0_23, %c0_24, %c0_25], %42 {strides = array<i32>} : memref<2x32x128xf32, #tpu.memory_space<vmem>>, vector<2x32x128xf32>,
    return
  }
  func.func @transform_0(%arg0: i32) -> (i32, i32, i32) {
    %c0_i32 = arith.constant 0 : i32
    %c0_i32_0 = arith.constant 0 : i32
    %c0_i32_1 = arith.constant 0 : i32
    return %arg0, %c0_i32, %c0_i32_0 : i32, i32, i32
  }
  func.func @transform_1(%arg0: i32) -> (i32, i32, i32) {
    %c0_i32 = arith.constant 0 : i32
    %c0_i32_0 = arith.constant 0 : i32
    %c0_i32_1 = arith.constant 0 : i32
    return %arg0, %c0_i32, %c0_i32_0 : i32, i32, i32
  }
  func.func @transform_2(%arg0: i32) -> (i32, i32) {
    %c0_i32 = arith.constant 0 : i32
    %c0_i32_0 = arith.constant 0 : i32
    %c0_i32_1 = arith.constant 0 : i32
    return %c0_i32, %c0_i32_0 : i32, i32
  }
  func.func @transform_3(%arg0: i32) -> (i32, i32) {
    %c0_i32 = arith.constant 0 : i32
    %c0_i32_0 = arith.constant 0 : i32
    %c0_i32_1 = arith.constant 0 : i32
    return %c0_i32, %c0_i32_0 : i32, i32
  }
  func.func @transform_4(%arg0: i32) -> (i32, i32) {
    %c0_i32 = arith.constant 0 : i32
    %c0_i32_0 = arith.constant 0 : i32
    %c0_i32_1 = arith.constant 0 : i32
    return %c0_i32, %c0_i32_0 : i32, i32
  }
  func.func @transform_5(%arg0: i32) -> (i32, i32) {
    %c0_i32 = arith.constant 0 : i32
    %c0_i32_0 = arith.constant 0 : i32
    %c0_i32_1 = arith.constant 0 : i32
    return %c0_i32, %c0_i32_0 : i32, i32
  }
  func.func @transform_6(%arg0: i32) -> (i32, i32) {
    %c0_i32 = arith.constant 0 : i32
    %c0_i32_0 = arith.constant 0 : i32
    %c0_i32_1 = arith.constant 0 : i32
    return %c0_i32, %c0_i32_0 : i32, i32
  }
  func.func @transform_7(%arg0: i32) -> (i32, i32, i32) {
    %c0_i32 = arith.constant 0 : i32
    %c0_i32_0 = arith.constant 0 : i32
    %c0_i32_1 = arith.constant 0 : i32
    return %arg0, %c0_i32, %c0_i32_0 : i32, i32, i32
  }
}

</mosaic_0001>

<llo_original>
// kernel: tpu_custom_call.1
$region0: #{tpu_custom_call.1}
  #allocation0 [shape = 'u32[]', space=smem, size = 0x4, offset = 0x4, fixed_abs, tag = 'smem constant byte address 0x4 - core index']
  #allocation1 [shape = 'u32[144,128]{1,0:T(1,128)}', space=vmem, size = 0x12000, scoped, tag = 'internal scratch']
  %s0 = inlined_call_operand.vmem [shape: f32[4,32,32], index: 0, kind: input, shape index: {}]
  %s1 = inlined_call_operand.vmem [shape: f32[4,32,20], index: 1, kind: input, shape index: {}]
  %s2 = inlined_call_operand.vmem [shape: f32[32,32], index: 2, kind: input, shape index: {}]
  %s3 = inlined_call_operand.vmem [shape: f32[20,16], index: 3, kind: input, shape index: {}]
  %s4 = inlined_call_operand.vmem [shape: f32[1,16], index: 4, kind: input, shape index: {}]
  %s5 = inlined_call_operand.vmem [shape: f32[16,128], index: 5, kind: input, shape index: {}]
  %s6 = inlined_call_operand.vmem [shape: f32[1,128], index: 6, kind: input, shape index: {}]
  %s7 = inlined_call_operand.hbm [shape: f32[4,32,128], index: 7, kind: output, shape index: {}]
  %s8 = sld [smem:[#allocation0]]
  $region61: #{tpu_custom_call.1} parent=0
    _
  %s10 = ssub.s32 1, %s8
  %s11 = scalar_select 0, %s10, %s8
  $region1: #{tpu_custom_call.1} parent=0
    #allocation2 [shape = 'u8[65536]{0}', space=vmem, size = 0x10000, scoped, tag = 'output window, operand 0']
    #allocation3 [shape = 's32[2]{0}', space=sflag, size = 0x8, scoped, tag = 'scoped memory for tpu_custom_call.1']
    %12 = vsyncpa [#allocation3], 0
    %s13 = scalar_lea.sflag [#allocation3], 1
    %14 = vsyncpa %s13, 0
    loop: start=0, step=1, limit=4
    $region2: #{tpu_custom_call.1} parent=1 // loop_pre_header
      _
    $region3: #{tpu_custom_call.1} parent=1 // loop_header
      %s16 = sphi 0, %s20
      %p17 = scmp.ge.s32.totalorder %s16, 4
      %s26 = sphi 0, %s28
      %s29 = sphi 0, %s26
      %s30 = sphi 0, %s29
      %s46 = sphi 0, %s30
      %s52 = sphi 0, %s54
      %s55 = sphi 0, %s52
      %s56 = sphi 0, %s55
      %s72 = sphi 0, %s56
      %s76 = sphi 0, %s76
      %s78 = sphi 0, %s76
      %s79 = sphi 0, %s78
      %s93 = sphi 0, %s79
      %s97 = sphi 0, %s97
      %s99 = sphi 0, %s97
      %s100 = sphi 0, %s99
      %s114 = sphi 0, %s100
      %s118 = sphi 0, %s118
      %s120 = sphi 0, %s118
      %s121 = sphi 0, %s120
      %s135 = sphi 0, %s121
      %s139 = sphi 0, %s139
      %s141 = sphi 0, %s139
      %s142 = sphi 0, %s141
      %s156 = sphi 0, %s142
      %s160 = sphi 0, %s160
      %s162 = sphi 0, %s160
      %s163 = sphi 0, %s162
      %s177 = sphi 0, %s163
      %s183 = sphi 0, %s185
      %s186 = sphi 0, %s183
      %s187 = sphi 0, %s186
      %s203 = sphi 0, %s187
    $region4: #{tpu_custom_call.1} parent=1 // loop_header_branch
      %19 = sbr.rel (%p17) target = $region8
    $region5: #{tpu_custom_call.1} parent=1 // loop_body
      %s21 = ssub.s32 %s16, 1
      %s22 = ssub.s32 %s16, 2
      %s23 = sadd.s32 %s16, 1
      %s24 = ssub.s32 %s16, %s23
      %p25 = scmp.eq.s32.totalorder %s24, 0
      %s27 = sadd.s32 %s26, 1
      %s28 = scalar_select %p25, %s26, %s27
      %p31 = pneg %p25
      %p32 = scmp.eq.s32.totalorder %s16, 1
      %p33 = por %p31, %p32
      %p34 = scmp.ne.s32.totalorder %s26, %s29
      %p35 = scmp.eq.s32.totalorder %s16, 0
      %p36 = por %p34, %p35
      %p37 = scmp.ne.s32.totalorder %s26, %s29
      %p38 = scmp.eq.s32.totalorder %s21, 1
      %p39 = por %p37, %p38
      %p40 = scmp.ne.s32.totalorder %s29, %s30
      %p41 = scmp.eq.s32.totalorder %s21, 0
      %p42 = por %p40, %p41
      %p43 = scmp.ne.s32.totalorder %s29, %s30
      %p44 = scmp.eq.s32.totalorder %s22, 1
      %p45 = por %p43, %p44
      %p47 = scmp.ne.s32.totalorder %s30, %s46
      %p48 = scmp.eq.s32.totalorder %s22, 0
      %p49 = por %p47, %p48
      %s50 = ssub.s32 %s16, %s23
      %p51 = scmp.eq.s32.totalorder %s50, 0
      %s53 = sadd.s32 %s52, 1
      %s54 = scalar_select %p51, %s52, %s53
      %p57 = pneg %p51
      %p58 = scmp.eq.s32.totalorder %s16, 1
      %p59 = por %p57, %p58
      %p60 = scmp.ne.s32.totalorder %s52, %s55
      %p61 = scmp.eq.s32.totalorder %s16, 0
      %p62 = por %p60, %p61
      %p63 = scmp.ne.s32.totalorder %s52, %s55
      %p64 = scmp.eq.s32.totalorder %s21, 1
      %p65 = por %p63, %p64
      %p66 = scmp.ne.s32.totalorder %s55, %s56
      %p67 = scmp.eq.s32.totalorder %s21, 0
      %p68 = por %p66, %p67
      %p69 = scmp.ne.s32.totalorder %s55, %s56
      %p70 = scmp.eq.s32.totalorder %s22, 1
      %p71 = por %p69, %p70
      %p73 = scmp.ne.s32.totalorder %s56, %s72
      %p74 = scmp.eq.s32.totalorder %s22, 0
      %p75 = por %p73, %p74
      %s77 = sadd.s32 %s76, 1
      %p80 = scmp.eq.s32.totalorder %s16, 1
      %p81 = scmp.ne.s32.totalorder %s76, %s78
      %p82 = scmp.eq.s32.totalorder %s16, 0
      %p83 = por %p81, %p82
      %p84 = scmp.ne.s32.totalorder %s76, %s78
      %p85 = scmp.eq.s32.totalorder %s21, 1
      %p86 = por %p84, %p85
      %p87 = scmp.ne.s32.totalorder %s78, %s79
      %p88 = scmp.eq.s32.totalorder %s21, 0
      %p89 = por %p87, %p88
      %p90 = scmp.ne.s32.totalorder %s78, %s79
      %p91 = scmp.eq.s32.totalorder %s22, 1
      %p92 = por %p90, %p91
      %p94 = scmp.ne.s32.totalorder %s79, %s93
      %p95 = scmp.eq.s32.totalorder %s22, 0
      %p96 = por %p94, %p95
      %s98 = sadd.s32 %s97, 1
      %p101 = scmp.eq.s32.totalorder %s16, 1
      %p102 = scmp.ne.s32.totalorder %s97, %s99
      %p103 = scmp.eq.s32.totalorder %s16, 0
      %p104 = por %p102, %p103
      %p105 = scmp.ne.s32.totalorder %s97, %s99
      %p106 = scmp.eq.s32.totalorder %s21, 1
      %p107 = por %p105, %p106
      %p108 = scmp.ne.s32.totalorder %s99, %s100
      %p109 = scmp.eq.s32.totalorder %s21, 0
      %p110 = por %p108, %p109
      %p111 = scmp.ne.s32.totalorder %s99, %s100
      %p112 = scmp.eq.s32.totalorder %s22, 1
      %p113 = por %p111, %p112
      %p115 = scmp.ne.s32.totalorder %s100, %s114
      %p116 = scmp.eq.s32.totalorder %s22, 0
      %p117 = por %p115, %p116
      %s119 = sadd.s32 %s118, 1
      %p122 = scmp.eq.s32.totalorder %s16, 1
      %p123 = scmp.ne.s32.totalorder %s118, %s120
      %p124 = scmp.eq.s32.totalorder %s16, 0
      %p125 = por %p123, %p124
      %p126 = scmp.ne.s32.totalorder %s118, %s120
      %p127 = scmp.eq.s32.totalorder %s21, 1
      %p128 = por %p126, %p127
      %p129 = scmp.ne.s32.totalorder %s120, %s121
      %p130 = scmp.eq.s32.totalorder %s21, 0
      %p131 = por %p129, %p130
      %p132 = scmp.ne.s32.totalorder %s120, %s121
      %p133 = scmp.eq.s32.totalorder %s22, 1
      %p134 = por %p132, %p133
      %p136 = scmp.ne.s32.totalorder %s121, %s135
      %p137 = scmp.eq.s32.totalorder %s22, 0
      %p138 = por %p136, %p137
      %s140 = sadd.s32 %s139, 1
      %p143 = scmp.eq.s32.totalorder %s16, 1
      %p144 = scmp.ne.s32.totalorder %s139, %s141
      %p145 = scmp.eq.s32.totalorder %s16, 0
      %p146 = por %p144, %p145
      %p147 = scmp.ne.s32.totalorder %s139, %s141
      %p148 = scmp.eq.s32.totalorder %s21, 1
      %p149 = por %p147, %p148
      %p150 = scmp.ne.s32.totalorder %s141, %s142
      %p151 = scmp.eq.s32.totalorder %s21, 0
      %p152 = por %p150, %p151
      %p153 = scmp.ne.s32.totalorder %s141, %s142
      %p154 = scmp.eq.s32.totalorder %s22, 1
      %p155 = por %p153, %p154
      %p157 = scmp.ne.s32.totalorder %s142, %s156
      %p158 = scmp.eq.s32.totalorder %s22, 0
      %p159 = por %p157, %p158
      %s161 = sadd.s32 %s160, 1
      %p164 = scmp.eq.s32.totalorder %s16, 1
      %p165 = scmp.ne.s32.totalorder %s160, %s162
      %p166 = scmp.eq.s32.totalorder %s16, 0
      %p167 = por %p165, %p166
      %p168 = scmp.ne.s32.totalorder %s160, %s162
      %p169 = scmp.eq.s32.totalorder %s21, 1
      %p170 = por %p168, %p169
      %p171 = scmp.ne.s32.totalorder %s162, %s163
      %p172 = scmp.eq.s32.totalorder %s21, 0
      %p173 = por %p171, %p172
      %p174 = scmp.ne.s32.totalorder %s162, %s163
      %p175 = scmp.eq.s32.totalorder %s22, 1
      %p176 = por %p174, %p175
      %p178 = scmp.ne.s32.totalorder %s163, %s177
      %p179 = scmp.eq.s32.totalorder %s22, 0
      %p180 = por %p178, %p179
      %s181 = ssub.s32 %s16, %s23
      %p182 = scmp.eq.s32.totalorder %s181, 0
      %s184 = sadd.s32 %s183, 1
      %s185 = scalar_select %p182, %s183, %s184
      %p188 = pneg %p182
      %p189 = scmp.eq.s32.totalorder %s16, 1
      %p190 = por %p188, %p189
      %p191 = scmp.ne.s32.totalorder %s183, %s186
      %p192 = scmp.eq.s32.totalorder %s16, 0
      %p193 = por %p191, %p192
      %p194 = scmp.ne.s32.totalorder %s183, %s186
      %p195 = scmp.eq.s32.totalorder %s21, 1
      %p196 = por %p194, %p195
      %p197 = scmp.ne.s32.totalorder %s186, %s187
      %p198 = scmp.eq.s32.totalorder %s21, 0
      %p199 = por %p197, %p198
      %p200 = scmp.ne.s32.totalorder %s186, %s187
      %p201 = scmp.eq.s32.totalorder %s22, 1
      %p202 = por %p200, %p201
      %p204 = scmp.ne.s32.totalorder %s187, %s203
      %p205 = scmp.eq.s32.totalorder %s22, 0
      %p206 = por %p204, %p205
      %p207 = scmp.le.s32.totalorder 1, %s16
      %p208 = scmp.lt.s32.totalorder %s16, 3
      %p209 = pnand %p207, %p208
      %p210 = pneg %p209
      // Predicated region
      $region9: #{tpu_custom_call.1} parent=5 // pred_check
        _
      $region10: #{tpu_custom_call.1} parent=5 // pred_check_branch
        %212 = sbr.rel (%p209) target = $region12
      $region11: #{tpu_custom_call.1} parent=5 // pred_region
        %s213 = ssub.s32 %s16, 1
        // Predicated region
        $region13: #{tpu_custom_call.1} parent=11 // pred_check
          %p214 = pneg %p89
        $region14: #{tpu_custom_call.1} parent=11 // pred_check_branch
          %216 = sbr.rel (%p214) target = $region16
        $region15: #{tpu_custom_call.1} parent=11 // pred_region
          _
        $region16: #{tpu_custom_call.1} parent=11 // pred_fallthru
          _
        // Predicated region
        $region17: #{tpu_custom_call.1} parent=11 // pred_check
          %p217 = pneg %p110
        $region18: #{tpu_custom_call.1} parent=11 // pred_check_branch
          %219 = sbr.rel (%p217) target = $region20
        $region19: #{tpu_custom_call.1} parent=11 // pred_region
          _
        $region20: #{tpu_custom_call.1} parent=11 // pred_fallthru
          _
        // Predicated region
        $region21: #{tpu_custom_call.1} parent=11 // pred_check
          %p220 = pneg %p131
        $region22: #{tpu_custom_call.1} parent=11 // pred_check_branch
          %222 = sbr.rel (%p220) target = $region24
        $region23: #{tpu_custom_call.1} parent=11 // pred_region
          _
        $region24: #{tpu_custom_call.1} parent=11 // pred_fallthru
          _
        // Predicated region
        $region25: #{tpu_custom_call.1} parent=11 // pred_check
          %p223 = pneg %p152
        $region26: #{tpu_custom_call.1} parent=11 // pred_check_branch
          %225 = sbr.rel (%p223) target = $region28
        $region27: #{tpu_custom_call.1} parent=11 // pred_region
          _
        $region28: #{tpu_custom_call.1} parent=11 // pred_fallthru
          _
        // Predicated region
        $region29: #{tpu_custom_call.1} parent=11 // pred_check
          %p226 = pneg %p173
        $region30: #{tpu_custom_call.1} parent=11 // pred_check_branch
          %228 = sbr.rel (%p226) target = $region32
        $region31: #{tpu_custom_call.1} parent=11 // pred_region
          _
        $region32: #{tpu_custom_call.1} parent=11 // pred_fallthru
          _
      $region12: #{tpu_custom_call.1} parent=5 // pred_fallthru
        _
      %p229 = scmp.lt.s32.totalorder %s16, 2
      // Predicated region
      $region33: #{tpu_custom_call.1} parent=5 // pred_check
        %p230 = pneg %p229
      $region34: #{tpu_custom_call.1} parent=5 // pred_check_branch
        %232 = sbr.rel (%p230) target = $region36
      $region35: #{tpu_custom_call.1} parent=5 // pred_region
        // Predicated region
        $region37: #{tpu_custom_call.1} parent=35 // pred_check
          %p233 = pneg %p36
        $region38: #{tpu_custom_call.1} parent=35 // pred_check_branch
          %235 = sbr.rel (%p233) target = $region40
        $region39: #{tpu_custom_call.1} parent=35 // pred_region
          %s236 = smul.u32 2, %s16
          %p237 = scmp.lt.s32.totalorder %s236, 3
          %s238 = scalar_select %p237, %s236, 3
          %s239 = smul.addr %s238, 4
          %s240 = smul.addr %s239, 8
          %s241 = scalar_lea.vmem %s0, %s240
          %s242 = smul.u32 2, %s16
        $region40: #{tpu_custom_call.1} parent=35 // pred_fallthru
          _
        // Predicated region
        $region41: #{tpu_custom_call.1} parent=35 // pred_check
          %p243 = pneg %p62
        $region42: #{tpu_custom_call.1} parent=35 // pred_check_branch
          %245 = sbr.rel (%p243) target = $region44
        $region43: #{tpu_custom_call.1} parent=35 // pred_region
          %s246 = smul.u32 2, %s16
          %p247 = scmp.lt.s32.totalorder %s246, 3
          %s248 = scalar_select %p247, %s246, 3
          %s249 = smul.addr %s248, 4
          %s250 = smul.addr %s249, 8
          %s251 = scalar_lea.vmem %s1, %s250
          %s252 = smul.u32 2, %s16
        $region44: #{tpu_custom_call.1} parent=35 // pred_fallthru
          _
      $region36: #{tpu_custom_call.1} parent=5 // pred_fallthru
        _
      %p253 = scmp.le.s32.totalorder 1, %s16
      %p254 = scmp.lt.s32.totalorder %s16, 3
      %p255 = pnand %p253, %p254
      %p256 = pneg %p255
      // Predicated region
      $region45: #{tpu_custom_call.1} parent=5 // pred_check
        _
      $region46: #{tpu_custom_call.1} parent=5 // pred_check_branch
        %258 = sbr.rel (%p255) target = $region48
      $region47: #{tpu_custom_call.1} parent=5 // pred_region
        %s259 = ssub.s32 %s16, 1
        %s260 = smul.u32 2, %s21
        %p261 = scmp.lt.s32.totalorder %s260, 3
        %s262 = scalar_select %p261, %s260, 3
        %s263 = smul.addr %s262, 4
        %s264 = smul.addr %s263, 8
        %s265 = scalar_lea.vmem %s0, %s264
        %p266 = pneg %p42
        %p267 = pneg %p39
        %s268 = smul.u32 2, %s21
        %p269 = scmp.lt.s32.totalorder %s268, 3
        %s270 = scalar_select %p269, %s268, 3
        %s271 = smul.addr %s270, 4
        %s272 = smul.addr %s271, 8
        %s273 = scalar_lea.vmem %s1, %s272
        %p274 = pneg %p68
        %p275 = pneg %p65
        %p276 = pneg %p89
        %p277 = pneg %p86
        %p278 = pneg %p110
        %p279 = pneg %p107
        %p280 = pneg %p131
        %p281 = pneg %p128
        %p282 = pneg %p152
        %p283 = pneg %p149
        %p284 = pneg %p173
        %p285 = pneg %p170
        %p286 = pneg %p199
        %p287 = pneg %p196
        %s288 = sand.u32 %s186, 1
        %s289 = scalar_lea.sflag [#allocation3], %s288
        %s290 = sand.u32 %s186, 1
        %s291 = smul.addr %s290, 64
        %s292 = scalar_lea.vmem [#allocation2], %s291
        %s293 = smul.u32 2, %s21
        %p294 = scmp.lt.s32.totalorder %s293, 3
        %s295 = scalar_select %p294, %s293, 3
        %s296 = smul.addr %s295, 4
        %s297 = smul.addr %s296, 8
        %s298 = scalar_lea.vmem %s0, %s297
        %s299 = smul.u32 2, %s21
        %s300 = smul.u32 2, %s21
        %p301 = scmp.lt.s32.totalorder %s300, 3
        %s302 = scalar_select %p301, %s300, 3
        %s303 = smul.addr %s302, 4
        %s304 = smul.addr %s303, 8
        %s305 = scalar_lea.vmem %s1, %s304
        %s306 = smul.u32 2, %s21
        %s307 = smul.u32 2, %s21
        %v308 = vld [vmem:[%s298] sm:$0xff]
        %v309 = vld [vmem:[%s298 + $0x8] sm:$0xff]
        %v310 = vld [vmem:[%s298 + $0x10] sm:$0xff]
        %v311 = vld [vmem:[%s298 + $0x18] sm:$0xff]
        %v312 = vld [vmem:[%s298 + $0x20] sm:$0xff]
        %v313 = vld [vmem:[%s298 + $0x28] sm:$0xff]
        %v314 = vld [vmem:[%s298 + $0x30] sm:$0xff]
        %v315 = vld [vmem:[%s298 + $0x38] sm:$0xff]
        %v316 = vld [vmem:[%s2] sm:$0xff]
        %v317 = vld [vmem:[%s2 + $0x8] sm:$0xff]
        %v318 = vld [vmem:[%s2 + $0x10] sm:$0xff]
        %v319 = vld [vmem:[%s2 + $0x18] sm:$0xff]
        %vm320 = vcmp.gt.f32.partialorder %v316, 0.0
        %vm321 = vcmp.gt.f32.partialorder %v317, 0.0
        %vm322 = vcmp.gt.f32.partialorder %v318, 0.0
        %vm323 = vcmp.gt.f32.partialorder %v319, 0.0
        %v324 = vsel %vm320, 1, 0
        %v325 = vsel %vm321, 1, 0
        %v326 = vsel %vm322, 1, 0
        %v327 = vsel %vm323, 1, 0
        %vm328 = vcmp.eq.s32.totalorder %v324, 1
        %vm329 = vcmp.eq.s32.totalorder %v325, 1
        %vm330 = vcmp.eq.s32.totalorder %v326, 1
        %vm331 = vcmp.eq.s32.totalorder %v327, 1
        %v332 = vsel %vm328, 1.0, %v308
        %v333 = vsel %vm329, 1.0, %v309
        %v334 = vsel %vm330, 1.0, %v310
        %v335 = vsel %vm331, 1.0, %v311
        %v336 = vsel %vm328, 1.0, %v312
        %v337 = vsel %vm329, 1.0, %v313
        %v338 = vsel %vm330, 1.0, %v314
        %v339 = vsel %vm331, 1.0, %v315
        %vm340 = vcmask 261120
        %v341 = vsel %vm340, %v332, 0.0
        %342 = vadd.xlane.f32.xlu0 %v341
        %v343 = vpop.xlane.xlu0 %342
        %v344 = vsel %vm340, %v333, 0.0
        %345 = vadd.xlane.f32.xlu0 %v344
        %v346 = vpop.xlane.xlu0 %345
        %v347 = vsel %vm340, %v334, 0.0
        %348 = vadd.xlane.f32.xlu0 %v347
        %v349 = vpop.xlane.xlu0 %348
        %v350 = vsel %vm340, %v335, 0.0
        %351 = vadd.xlane.f32.xlu0 %v350
        %v352 = vpop.xlane.xlu0 %351
        %v353 = vsel %vm340, %v336, 0.0
        %354 = vadd.xlane.f32.xlu0 %v353
        %v355 = vpop.xlane.xlu0 %354
        %v356 = vsel %vm340, %v337, 0.0
        %357 = vadd.xlane.f32.xlu0 %v356
        %v358 = vpop.xlane.xlu0 %357
        %v359 = vsel %vm340, %v338, 0.0
        %360 = vadd.xlane.f32.xlu0 %v359
        %v361 = vpop.xlane.xlu0 %360
        %v362 = vsel %vm340, %v339, 0.0
        %363 = vadd.xlane.f32.xlu0 %v362
        %v364 = vpop.xlane.xlu0 %363
        %v365 = vmax.f32 %v343, 1.0
        %v366 = vmax.f32 %v346, 1.0
        %v367 = vmax.f32 %v349, 1.0
        %v368 = vmax.f32 %v352, 1.0
        %v369 = vmax.f32 %v355, 1.0
        %v370 = vmax.f32 %v358, 1.0
        %v371 = vmax.f32 %v361, 1.0
        %v372 = vmax.f32 %v364, 1.0
        %v373 = vrsqrt.pop %v365
        %v374 = vrsqrt.pop %v366
        %v375 = vrsqrt.pop %v367
        %v376 = vrsqrt.pop %v368
        %v377 = vrsqrt.pop %v369
        %v378 = vrsqrt.pop %v370
        %v379 = vrsqrt.pop %v371
        %v380 = vrsqrt.pop %v372
        %v381 = vld [vmem:[%s305] sm:$0xff]
        %v382 = vld [vmem:[%s305 + $0x8] sm:$0xff]
        %v383 = vld [vmem:[%s305 + $0x10] sm:$0xff]
        %v384 = vld [vmem:[%s305 + $0x18] sm:$0xff]
        %v385 = vld [vmem:[%s305 + $0x20] sm:$0xff]
        %v386 = vld [vmem:[%s305 + $0x28] sm:$0xff]
        %v387 = vld [vmem:[%s305 + $0x30] sm:$0xff]
        %v388 = vld [vmem:[%s305 + $0x38] sm:$0xff]
        %v389 = vld [vmem:[%s3] sm:$0xff]
        %v390 = vld [vmem:[%s3 + $0x8] sm:$0xff]
        %v391 = vld [vmem:[%s3 + $0x10] sm:$0xf]
        %vm392 = vcmask 162816
        %v394 = vsel %vm392, %v381, 0
        %v397 = vsel %vm392, %v382, 0
        %v400 = vsel %vm392, %v383, 0
        %v403 = vsel %vm392, %v384, 0
        %v406 = vsel %vm392, %v385, 0
        %v409 = vsel %vm392, %v386, 0
        %v412 = vsel %vm392, %v387, 0
        %v415 = vsel %vm392, %v388, 0
        %vm417 = vcmask 1043456
        %v419 = vsel %vm417, %v391, 0
        %421 = vmatprep.subr.mxu0 0.0
        %422 = vmatpush1.msra.mxu0 %v389
        %423 = vmatprep.subr.mxu0 0.0
        %424 = vmatpush1.msra.mxu0 %v390
        %425 = vmatprep.subr.mxu0 0.0
        %426 = vmatpush1.msra.mxu0 %v419
        %427 = vmatprep.subr.mxu0 0.0
        %428 = vmatpush1.msra.mxu0 0.0
        %429 = vmatprep.subr.mxu0 0.0
        %430 = vmatpush1.msra.mxu0 0.0
        %431 = vmatprep.subr.mxu0 0.0
        %432 = vmatpush1.msra.mxu0 0.0
        %433 = vmatprep.subr.mxu0 0.0
        %434 = vmatpush1.msra.mxu0 0.0
        %435 = vmatprep.subr.mxu0 0.0
        %436 = vmatpush1.msra.mxu0 0.0
        %437 = vmatprep.subr.mxu0 0.0
        %438 = vmatpush1.msra.mxu0 0.0
        %439 = vmatprep.subr.mxu0 0.0
        %440 = vmatpush1.msra.mxu0 0.0
        %441 = vmatprep.subr.mxu0 0.0
        %442 = vmatpush1.msra.mxu0 0.0
        %443 = vmatprep.subr.mxu0 0.0
        %444 = vmatpush1.msra.mxu0 0.0
        %445 = vmatprep.subr.mxu0 0.0
        %446 = vmatpush1.msra.mxu0 0.0
        %447 = vmatprep.subr.mxu0 0.0
        %448 = vmatpush1.msra.mxu0 0.0
        %449 = vmatprep.subr.mxu0 0.0
        %450 = vmatpush1.msra.mxu0 0.0
        %451 = vmatprep.subr.mxu0 0.0
        %452 = vmatpush1.msra.mxu0 0.0
        %453 = vmatprep.subr.mxu0 0.0
        %454 = vmatpush1.msra.mxu0 0.0
        %455 = vmatprep.subr.mxu0 0.0
        %456 = vmatpush1.msra.mxu0 0.0
        %457 = vmatprep.subr.mxu0 0.0
        %458 = vmatpush1.msra.mxu0 0.0
        %459 = vmatprep.subr.mxu0 0.0
        %460 = vmatpush1.msra.mxu0 0.0
        %461 = vmatprep.subr.mxu0 0.0
        %462 = vmatpush1.msra.mxu0 0.0
        %463 = vmatprep.subr.mxu0 0.0
        %464 = vmatpush1.msra.mxu0 0.0
        %465 = vmatprep.subr.mxu0 0.0
        %466 = vmatpush1.msra.mxu0 0.0
        %467 = vmatprep.subr.mxu0 0.0
        %468 = vmatpush1.msra.mxu0 0.0
        %469 = vmatprep.subr.mxu0 0.0
        %470 = vmatpush1.msra.mxu0 0.0
        %471 = vmatprep.subr.mxu0 0.0
        %472 = vmatpush1.msra.mxu0 0.0
        %473 = vmatprep.subr.mxu0 0.0
        %474 = vmatpush1.msra.mxu0 0.0
        %475 = vmatprep.subr.mxu0 0.0
        %476 = vmatpush1.msra.mxu0 0.0
        %477 = vmatprep.subr.mxu0 0.0
        %478 = vmatpush1.msra.mxu0 0.0
        %479 = vmatprep.subr.mxu0 0.0
        %480 = vmatpush1.msra.mxu0 0.0
        %481 = vmatprep.subr.mxu0 0.0
        %482 = vmatpush1.msra.mxu0 0.0
        %483 = vmatprep.subr.mxu0 0.0
        %484 = vmatpush1.msra.mxu0 0.0
        %485 = vmatprep.mubr.f32.mxu0 0.0
        %486 = vmatmul.mubr.f32.gmra.mrb[0].mxu0 %v394
        %v487 = vpop.f32.mrb[0].mxu0
        %v488 = vadd.f32 0.0, %v487
        %v489 = vpop.f32.mrb[0].mxu0
        %490 = vmatprep.mubr.f32.mxu0 0.0
        %491 = vmatmul.mubr.f32.gmra.mrb[0].mxu0 %v397
        %v492 = vpop.f32.mrb[0].mxu0
        %v493 = vadd.f32 0.0, %v492
        %v494 = vpop.f32.mrb[0].mxu0
        %495 = vmatprep.mubr.f32.mxu0 0.0
        %496 = vmatmul.mubr.f32.gmra.mrb[0].mxu0 %v400
        %v497 = vpop.f32.mrb[0].mxu0
        %v498 = vadd.f32 0.0, %v497
        %v499 = vpop.f32.mrb[0].mxu0
        %500 = vmatprep.mubr.f32.mxu0 0.0
        %501 = vmatmul.mubr.f32.gmra.mrb[0].mxu0 %v403
        %v502 = vpop.f32.mrb[0].mxu0
        %v503 = vadd.f32 0.0, %v502
        %v504 = vpop.f32.mrb[0].mxu0
        %505 = vmatprep.mubr.f32.mxu0 0.0
        %506 = vmatmul.mubr.f32.gmra.mrb[0].mxu0 %v406
        %v507 = vpop.f32.mrb[0].mxu0
        %v508 = vadd.f32 0.0, %v507
        %v509 = vpop.f32.mrb[0].mxu0
        %510 = vmatprep.mubr.f32.mxu0 0.0
        %511 = vmatmul.mubr.f32.gmra.mrb[0].mxu0 %v409
        %v512 = vpop.f32.mrb[0].mxu0
        %v513 = vadd.f32 0.0, %v512
        %v514 = vpop.f32.mrb[0].mxu0
        %515 = vmatprep.mubr.f32.mxu0 0.0
        %516 = vmatmul.mubr.f32.gmra.mrb[0].mxu0 %v412
        %v517 = vpop.f32.mrb[0].mxu0
        %v518 = vadd.f32 0.0, %v517
        %v519 = vpop.f32.mrb[0].mxu0
        %520 = vmatprep.mubr.f32.mxu0 0.0
        %521 = vmatmul.mubr.f32.gmra.mrb[0].mxu0 %v415
        %v522 = vpop.f32.mrb[0].mxu0
        %v523 = vadd.f32 0.0, %v522
        %v524 = vpop.f32.mrb[0].mxu0
        %525 = vdwg.mxu0
        %v526 = vmul.f32 %v373, %v488
        %v527 = vmul.f32 %v374, %v493
        %v528 = vmul.f32 %v375, %v498
        %v529 = vmul.f32 %v376, %v503
        %v530 = vmul.f32 %v377, %v508
        %v531 = vmul.f32 %v378, %v513
        %v532 = vmul.f32 %v379, %v518
        %v533 = vmul.f32 %v380, %v523
        %v535 = vsel %vm340, %v332, 0
        %v538 = vsel %vm340, %v333, 0
        %v541 = vsel %vm340, %v334, 0
        %v544 = vsel %vm340, %v335, 0
        %546 = vmatprep.subr.mxu0 0.0
        %547 = vmatpush1.msra.mxu0 %v526
        %548 = vmatprep.subr.mxu0 0.0
        %549 = vmatpush1.msra.mxu0 %v527
        %550 = vmatprep.subr.mxu0 0.0
        %551 = vmatpush1.msra.mxu0 %v528
        %552 = vmatprep.subr.mxu0 0.0
        %553 = vmatpush1.msra.mxu0 %v529
        %554 = vmatprep.subr.mxu0 0.0
        %555 = vmatpush1.msra.mxu0 0.0
        %556 = vmatprep.subr.mxu0 0.0
        %557 = vmatpush1.msra.mxu0 0.0
        %558 = vmatprep.subr.mxu0 0.0
        %559 = vmatpush1.msra.mxu0 0.0
        %560 = vmatprep.subr.mxu0 0.0
        %561 = vmatpush1.msra.mxu0 0.0
        %562 = vmatprep.subr.mxu0 0.0
        %563 = vmatpush1.msra.mxu0 0.0
        %564 = vmatprep.subr.mxu0 0.0
        %565 = vmatpush1.msra.mxu0 0.0
        %566 = vmatprep.subr.mxu0 0.0
        %567 = vmatpush1.msra.mxu0 0.0
        %568 = vmatprep.subr.mxu0 0.0
        %569 = vmatpush1.msra.mxu0 0.0
        %570 = vmatprep.subr.mxu0 0.0
        %571 = vmatpush1.msra.mxu0 0.0
        %572 = vmatprep.subr.mxu0 0.0
        %573 = vmatpush1.msra.mxu0 0.0
        %574 = vmatprep.subr.mxu0 0.0
        %575 = vmatpush1.msra.mxu0 0.0
        %576 = vmatprep.subr.mxu0 0.0
        %577 = vmatpush1.msra.mxu0 0.0
        %578 = vmatprep.subr.mxu0 0.0
        %579 = vmatpush1.msra.mxu0 0.0
        %580 = vmatprep.subr.mxu0 0.0
        %581 = vmatpush1.msra.mxu0 0.0
        %582 = vmatprep.subr.mxu0 0.0
        %583 = vmatpush1.msra.mxu0 0.0
        %584 = vmatprep.subr.mxu0 0.0
        %585 = vmatpush1.msra.mxu0 0.0
        %586 = vmatprep.subr.mxu0 0.0
        %587 = vmatpush1.msra.mxu0 0.0
        %588 = vmatprep.subr.mxu0 0.0
        %589 = vmatpush1.msra.mxu0 0.0
        %590 = vmatprep.subr.mxu0 0.0
        %591 = vmatpush1.msra.mxu0 0.0
        %592 = vmatprep.subr.mxu0 0.0
        %593 = vmatpush1.msra.mxu0 0.0
        %594 = vmatprep.subr.mxu0 0.0
        %595 = vmatpush1.msra.mxu0 0.0
        %596 = vmatprep.subr.mxu0 0.0
        %597 = vmatpush1.msra.mxu0 0.0
        %598 = vmatprep.subr.mxu0 0.0
        %599 = vmatpush1.msra.mxu0 0.0
        %600 = vmatprep.subr.mxu0 0.0
        %601 = vmatpush1.msra.mxu0 0.0
        %602 = vmatprep.subr.mxu0 0.0
        %603 = vmatpush1.msra.mxu0 0.0
        %604 = vmatprep.subr.mxu0 0.0
        %605 = vmatpush1.msra.mxu0 0.0
        %606 = vmatprep.subr.mxu0 0.0
        %607 = vmatpush1.msra.mxu0 0.0
        %608 = vmatprep.subr.mxu0 0.0
        %609 = vmatpush1.msra.mxu0 0.0
        %610 = vmatprep.mubr.f32.mxu0 0.0
        %611 = vmatmul.mubr.f32.gmra.mrb[0].mxu0 %v535
        %v612 = vpop.f32.mrb[0].mxu0
        %v613 = vadd.f32 0.0, %v612
        %v614 = vpop.f32.mrb[0].mxu0
        %615 = vmatprep.mubr.f32.mxu0 0.0
        %616 = vmatmul.mubr.f32.gmra.mrb[0].mxu0 %v538
        %v617 = vpop.f32.mrb[0].mxu0
        %v618 = vadd.f32 0.0, %v617
        %v619 = vpop.f32.mrb[0].mxu0
        %620 = vmatprep.mubr.f32.mxu0 0.0
        %621 = vmatmul.mubr.f32.gmra.mrb[0].mxu0 %v541
        %v622 = vpop.f32.mrb[0].mxu0
        %v623 = vadd.f32 0.0, %v622
        %v624 = vpop.f32.mrb[0].mxu0
        %625 = vmatprep.mubr.f32.mxu0 0.0
        %626 = vmatmul.mubr.f32.gmra.mrb[0].mxu0 %v544
        %v627 = vpop.f32.mrb[0].mxu0
        %v628 = vadd.f32 0.0, %v627
        %v629 = vpop.f32.mrb[0].mxu0
        %630 = vdwg.mxu0
        %v632 = vsel %vm340, %v336, 0
        %v635 = vsel %vm340, %v337, 0
        %v638 = vsel %vm340, %v338, 0
        %v641 = vsel %vm340, %v339, 0
        %643 = vmatprep.subr.mxu0 0.0
        %644 = vmatpush1.msra.mxu0 %v530
        %645 = vmatprep.subr.mxu0 0.0
        %646 = vmatpush1.msra.mxu0 %v531
        %647 = vmatprep.subr.mxu0 0.0
        %648 = vmatpush1.msra.mxu0 %v532
        %649 = vmatprep.subr.mxu0 0.0
        %650 = vmatpush1.msra.mxu0 %v533
        %651 = vmatprep.subr.mxu0 0.0
        %652 = vmatpush1.msra.mxu0 0.0
        %653 = vmatprep.subr.mxu0 0.0
        %654 = vmatpush1.msra.mxu0 0.0
        %655 = vmatprep.subr.mxu0 0.0
        %656 = vmatpush1.msra.mxu0 0.0
        %657 = vmatprep.subr.mxu0 0.0
        %658 = vmatpush1.msra.mxu0 0.0
        %659 = vmatprep.subr.mxu0 0.0
        %660 = vmatpush1.msra.mxu0 0.0
        %661 = vmatprep.subr.mxu0 0.0
        %662 = vmatpush1.msra.mxu0 0.0
        %663 = vmatprep.subr.mxu0 0.0
        %664 = vmatpush1.msra.mxu0 0.0
        %665 = vmatprep.subr.mxu0 0.0
        %666 = vmatpush1.msra.mxu0 0.0
        %667 = vmatprep.subr.mxu0 0.0
        %668 = vmatpush1.msra.mxu0 0.0
        %669 = vmatprep.subr.mxu0 0.0
        %670 = vmatpush1.msra.mxu0 0.0
        %671 = vmatprep.subr.mxu0 0.0
        %672 = vmatpush1.msra.mxu0 0.0
        %673 = vmatprep.subr.mxu0 0.0
        %674 = vmatpush1.msra.mxu0 0.0
        %675 = vmatprep.subr.mxu0 0.0
        %676 = vmatpush1.msra.mxu0 0.0
        %677 = vmatprep.subr.mxu0 0.0
        %678 = vmatpush1.msra.mxu0 0.0
        %679 = vmatprep.subr.mxu0 0.0
        %680 = vmatpush1.msra.mxu0 0.0
        %681 = vmatprep.subr.mxu0 0.0
        %682 = vmatpush1.msra.mxu0 0.0
        %683 = vmatprep.subr.mxu0 0.0
        %684 = vmatpush1.msra.mxu0 0.0
        %685 = vmatprep.subr.mxu0 0.0
        %686 = vmatpush1.msra.mxu0 0.0
        %687 = vmatprep.subr.mxu0 0.0
        %688 = vmatpush1.msra.mxu0 0.0
        %689 = vmatprep.subr.mxu0 0.0
        %690 = vmatpush1.msra.mxu0 0.0
        %691 = vmatprep.subr.mxu0 0.0
        %692 = vmatpush1.msra.mxu0 0.0
        %693 = vmatprep.subr.mxu0 0.0
        %694 = vmatpush1.msra.mxu0 0.0
        %695 = vmatprep.subr.mxu0 0.0
        %696 = vmatpush1.msra.mxu0 0.0
        %697 = vmatprep.subr.mxu0 0.0
        %698 = vmatpush1.msra.mxu0 0.0
        %699 = vmatprep.subr.mxu0 0.0
        %700 = vmatpush1.msra.mxu0 0.0
        %701 = vmatprep.subr.mxu0 0.0
        %702 = vmatpush1.msra.mxu0 0.0
        %703 = vmatprep.subr.mxu0 0.0
        %704 = vmatpush1.msra.mxu0 0.0
        %705 = vmatprep.subr.mxu0 0.0
        %706 = vmatpush1.msra.mxu0 0.0
        %707 = vmatprep.mubr.f32.mxu0 0.0
        %708 = vmatmul.mubr.f32.gmra.mrb[0].mxu0 %v632
        %v709 = vpop.f32.mrb[0].mxu0
        %v710 = vadd.f32 0.0, %v709
        %v711 = vpop.f32.mrb[0].mxu0
        %712 = vmatprep.mubr.f32.mxu0 0.0
        %713 = vmatmul.mubr.f32.gmra.mrb[0].mxu0 %v635
        %v714 = vpop.f32.mrb[0].mxu0
        %v715 = vadd.f32 0.0, %v714
        %v716 = vpop.f32.mrb[0].mxu0
        %717 = vmatprep.mubr.f32.mxu0 0.0
        %718 = vmatmul.mubr.f32.gmra.mrb[0].mxu0 %v638
        %v719 = vpop.f32.mrb[0].mxu0
        %v720 = vadd.f32 0.0, %v719
        %v721 = vpop.f32.mrb[0].mxu0
        %722 = vmatprep.mubr.f32.mxu0 0.0
        %723 = vmatmul.mubr.f32.gmra.mrb[0].mxu0 %v641
        %v724 = vpop.f32.mrb[0].mxu0
        %v725 = vadd.f32 0.0, %v724
        %v726 = vpop.f32.mrb[0].mxu0
        %727 = vdwg.mxu0
        %v728 = vmul.f32 %v373, %v613
        %v729 = vmul.f32 %v374, %v618
        %v730 = vmul.f32 %v375, %v623
        %v731 = vmul.f32 %v376, %v628
        %v732 = vmul.f32 %v377, %v710
        %v733 = vmul.f32 %v378, %v715
        %v734 = vmul.f32 %v379, %v720
        %v735 = vmul.f32 %v380, %v725
        %v736 = vld [vmem:[%s4] sm:$0x1]
        %v738 = vlaneseq
        %v739 = vshrl.u32 %v738, 7
        %v740 = vsub.s32 0, %v739
        %v741 = vrot.slane %v736, %v740
        %v743 = vadd.f32 %v728, %v741
        %v744 = vadd.f32 %v729, %v741
        %v745 = vadd.f32 %v730, %v741
        %v746 = vadd.f32 %v731, %v741
        %v747 = vadd.f32 %v732, %v741
        %v748 = vadd.f32 %v733, %v741
        %v749 = vadd.f32 %v734, %v741
        %v750 = vadd.f32 %v735, %v741
        %v751 = vmax.f32 %v743, 0.0
        %v752 = vmax.f32 %v744, 0.0
        %v753 = vmax.f32 %v745, 0.0
        %v754 = vmax.f32 %v746, 0.0
        %v755 = vmax.f32 %v747, 0.0
        %v756 = vmax.f32 %v748, 0.0
        %v757 = vmax.f32 %v749, 0.0
        %v758 = vmax.f32 %v750, 0.0
        %v759 = vld [vmem:[%s5] sm:$0xff]
        %v760 = vld [vmem:[%s5 + $0x8] sm:$0xff]
        %vm761 = vcmask 130048
        %v763 = vsel %vm761, %v751, 0
        %v766 = vsel %vm761, %v752, 0
        %v769 = vsel %vm761, %v753, 0
        %v772 = vsel %vm761, %v754, 0
        %v775 = vsel %vm761, %v755, 0
        %v778 = vsel %vm761, %v756, 0
        %v781 = vsel %vm761, %v757, 0
        %v784 = vsel %vm761, %v758, 0
        %786 = vmatprep.subr.mxu0 0.0
        %787 = vmatpush1.msra.mxu0 %v759
        %788 = vmatprep.subr.mxu0 0.0
        %789 = vmatpush1.msra.mxu0 %v760
        %790 = vmatprep.subr.mxu0 0.0
        %791 = vmatpush1.msra.mxu0 0.0
        %792 = vmatprep.subr.mxu0 0.0
        %793 = vmatpush1.msra.mxu0 0.0
        %794 = vmatprep.subr.mxu0 0.0
        %795 = vmatpush1.msra.mxu0 0.0
        %796 = vmatprep.subr.mxu0 0.0
        %797 = vmatpush1.msra.mxu0 0.0
        %798 = vmatprep.subr.mxu0 0.0
        %799 = vmatpush1.msra.mxu0 0.0
        %800 = vmatprep.subr.mxu0 0.0
        %801 = vmatpush1.msra.mxu0 0.0
        %802 = vmatprep.subr.mxu0 0.0
        %803 = vmatpush1.msra.mxu0 0.0
        %804 = vmatprep.subr.mxu0 0.0
        %805 = vmatpush1.msra.mxu0 0.0
        %806 = vmatprep.subr.mxu0 0.0
        %807 = vmatpush1.msra.mxu0 0.0
        %808 = vmatprep.subr.mxu0 0.0
        %809 = vmatpush1.msra.mxu0 0.0
        %810 = vmatprep.subr.mxu0 0.0
        %811 = vmatpush1.msra.mxu0 0.0
        %812 = vmatprep.subr.mxu0 0.0
        %813 = vmatpush1.msra.mxu0 0.0
        %814 = vmatprep.subr.mxu0 0.0
        %815 = vmatpush1.msra.mxu0 0.0
        %816 = vmatprep.subr.mxu0 0.0
        %817 = vmatpush1.msra.mxu0 0.0
        %818 = vmatprep.subr.mxu0 0.0
        %819 = vmatpush1.msra.mxu0 0.0
        %820 = vmatprep.subr.mxu0 0.0
        %821 = vmatpush1.msra.mxu0 0.0
        %822 = vmatprep.subr.mxu0 0.0
        %823 = vmatpush1.msra.mxu0 0.0
        %824 = vmatprep.subr.mxu0 0.0
        %825 = vmatpush1.msra.mxu0 0.0
        %826 = vmatprep.subr.mxu0 0.0
        %827 = vmatpush1.msra.mxu0 0.0
        %828 = vmatprep.subr.mxu0 0.0
        %829 = vmatpush1.msra.mxu0 0.0
        %830 = vmatprep.subr.mxu0 0.0
        %831 = vmatpush1.msra.mxu0 0.0
        %832 = vmatprep.subr.mxu0 0.0
        %833 = vmatpush1.msra.mxu0 0.0
        %834 = vmatprep.subr.mxu0 0.0
        %835 = vmatpush1.msra.mxu0 0.0
        %836 = vmatprep.subr.mxu0 0.0
        %837 = vmatpush1.msra.mxu0 0.0
        %838 = vmatprep.subr.mxu0 0.0
        %839 = vmatpush1.msra.mxu0 0.0
        %840 = vmatprep.subr.mxu0 0.0
        %841 = vmatpush1.msra.mxu0 0.0
        %842 = vmatprep.subr.mxu0 0.0
        %843 = vmatpush1.msra.mxu0 0.0
        %844 = vmatprep.subr.mxu0 0.0
        %845 = vmatpush1.msra.mxu0 0.0
        %846 = vmatprep.subr.mxu0 0.0
        %847 = vmatpush1.msra.mxu0 0.0
        %848 = vmatprep.subr.mxu0 0.0
        %849 = vmatpush1.msra.mxu0 0.0
        %850 = vmatprep.mubr.f32.mxu0 0.0
        %851 = vmatmul.mubr.f32.gmra.mrb[0].mxu0 %v763
        %v852 = vpop.f32.mrb[0].mxu0
        %v853 = vadd.f32 0.0, %v852
        %v854 = vpop.f32.mrb[0].mxu0
        %855 = vmatprep.mubr.f32.mxu0 0.0
        %856 = vmatmul.mubr.f32.gmra.mrb[0].mxu0 %v766
        %v857 = vpop.f32.mrb[0].mxu0
        %v858 = vadd.f32 0.0, %v857
        %v859 = vpop.f32.mrb[0].mxu0
        %860 = vmatprep.mubr.f32.mxu0 0.0
        %861 = vmatmul.mubr.f32.gmra.mrb[0].mxu0 %v769
        %v862 = vpop.f32.mrb[0].mxu0
        %v863 = vadd.f32 0.0, %v862
        %v864 = vpop.f32.mrb[0].mxu0
        %865 = vmatprep.mubr.f32.mxu0 0.0
        %866 = vmatmul.mubr.f32.gmra.mrb[0].mxu0 %v772
        %v867 = vpop.f32.mrb[0].mxu0
        %v868 = vadd.f32 0.0, %v867
        %v869 = vpop.f32.mrb[0].mxu0
        %870 = vmatprep.mubr.f32.mxu0 0.0
        %871 = vmatmul.mubr.f32.gmra.mrb[0].mxu0 %v775
        %v872 = vpop.f32.mrb[0].mxu0
        %v873 = vadd.f32 0.0, %v872
        %v874 = vpop.f32.mrb[0].mxu0
        %875 = vmatprep.mubr.f32.mxu0 0.0
        %876 = vmatmul.mubr.f32.gmra.mrb[0].mxu0 %v778
        %v877 = vpop.f32.mrb[0].mxu0
        %v878 = vadd.f32 0.0, %v877
        %v879 = vpop.f32.mrb[0].mxu0
        %880 = vmatprep.mubr.f32.mxu0 0.0
        %881 = vmatmul.mubr.f32.gmra.mrb[0].mxu0 %v781
        %v882 = vpop.f32.mrb[0].mxu0
        %v883 = vadd.f32 0.0, %v882
        %v884 = vpop.f32.mrb[0].mxu0
        %885 = vmatprep.mubr.f32.mxu0 0.0
        %886 = vmatmul.mubr.f32.gmra.mrb[0].mxu0 %v784
        %v887 = vpop.f32.mrb[0].mxu0
        %v888 = vadd.f32 0.0, %v887
        %v889 = vpop.f32.mrb[0].mxu0
        %890 = vdwg.mxu0
        %v891 = vmul.f32 %v373, %v853
        %v892 = vmul.f32 %v374, %v858
        %v893 = vmul.f32 %v375, %v863
        %v894 = vmul.f32 %v376, %v868
        %v895 = vmul.f32 %v377, %v873
        %v896 = vmul.f32 %v378, %v878
        %v897 = vmul.f32 %v379, %v883
        %v898 = vmul.f32 %v380, %v888
        %899 = vmatprep.subr.mxu0 0.0
        %900 = vmatpush1.msra.mxu0 %v891
        %901 = vmatprep.subr.mxu0 0.0
        %902 = vmatpush1.msra.mxu0 %v892
        %903 = vmatprep.subr.mxu0 0.0
        %904 = vmatpush1.msra.mxu0 %v893
        %905 = vmatprep.subr.mxu0 0.0
        %906 = vmatpush1.msra.mxu0 %v894
        %907 = vmatprep.subr.mxu0 0.0
        %908 = vmatpush1.msra.mxu0 0.0
        %909 = vmatprep.subr.mxu0 0.0
        %910 = vmatpush1.msra.mxu0 0.0
        %911 = vmatprep.subr.mxu0 0.0
        %912 = vmatpush1.msra.mxu0 0.0
        %913 = vmatprep.subr.mxu0 0.0
        %914 = vmatpush1.msra.mxu0 0.0
        %915 = vmatprep.subr.mxu0 0.0
        %916 = vmatpush1.msra.mxu0 0.0
        %917 = vmatprep.subr.mxu0 0.0
        %918 = vmatpush1.msra.mxu0 0.0
        %919 = vmatprep.subr.mxu0 0.0
        %920 = vmatpush1.msra.mxu0 0.0
        %921 = vmatprep.subr.mxu0 0.0
        %922 = vmatpush1.msra.mxu0 0.0
        %923 = vmatprep.subr.mxu0 0.0
        %924 = vmatpush1.msra.mxu0 0.0
        %925 = vmatprep.subr.mxu0 0.0
        %926 = vmatpush1.msra.mxu0 0.0
        %927 = vmatprep.subr.mxu0 0.0
        %928 = vmatpush1.msra.mxu0 0.0
        %929 = vmatprep.subr.mxu0 0.0
        %930 = vmatpush1.msra.mxu0 0.0
        %931 = vmatprep.subr.mxu0 0.0
        %932 = vmatpush1.msra.mxu0 0.0
        %933 = vmatprep.subr.mxu0 0.0
        %934 = vmatpush1.msra.mxu0 0.0
        %935 = vmatprep.subr.mxu0 0.0
        %936 = vmatpush1.msra.mxu0 0.0
        %937 = vmatprep.subr.mxu0 0.0
        %938 = vmatpush1.msra.mxu0 0.0
        %939 = vmatprep.subr.mxu0 0.0
        %940 = vmatpush1.msra.mxu0 0.0
        %941 = vmatprep.subr.mxu0 0.0
        %942 = vmatpush1.msra.mxu0 0.0
        %943 = vmatprep.subr.mxu0 0.0
        %944 = vmatpush1.msra.mxu0 0.0
        %945 = vmatprep.subr.mxu0 0.0
        %946 = vmatpush1.msra.mxu0 0.0
        %947 = vmatprep.subr.mxu0 0.0
        %948 = vmatpush1.msra.mxu0 0.0
        %949 = vmatprep.subr.mxu0 0.0
        %950 = vmatpush1.msra.mxu0 0.0
        %951 = vmatprep.subr.mxu0 0.0
        %952 = vmatpush1.msra.mxu0 0.0
        %953 = vmatprep.subr.mxu0 0.0
        %954 = vmatpush1.msra.mxu0 0.0
        %955 = vmatprep.subr.mxu0 0.0
        %956 = vmatpush1.msra.mxu0 0.0
        %957 = vmatprep.subr.mxu0 0.0
        %958 = vmatpush1.msra.mxu0 0.0
        %959 = vmatprep.subr.mxu0 0.0
        %960 = vmatpush1.msra.mxu0 0.0
        %961 = vmatprep.subr.mxu0 0.0
        %962 = vmatpush1.msra.mxu0 0.0
        %963 = vmatprep.mubr.f32.mxu0 0.0
        %964 = vmatmul.mubr.f32.gmra.mrb[0].mxu0 %v535
        %v965 = vpop.f32.mrb[0].mxu0
        %v966 = vadd.f32 0.0, %v965
        %v967 = vpop.f32.mrb[0].mxu0
        %968 = vmatprep.mubr.f32.mxu0 0.0
        %969 = vmatmul.mubr.f32.gmra.mrb[0].mxu0 %v538
        %v970 = vpop.f32.mrb[0].mxu0
        %v971 = vadd.f32 0.0, %v970
        %v972 = vpop.f32.mrb[0].mxu0
        %973 = vmatprep.mubr.f32.mxu0 0.0
        %974 = vmatmul.mubr.f32.gmra.mrb[0].mxu0 %v541
        %v975 = vpop.f32.mrb[0].mxu0
        %v976 = vadd.f32 0.0, %v975
        %v977 = vpop.f32.mrb[0].mxu0
        %978 = vmatprep.mubr.f32.mxu0 0.0
        %979 = vmatmul.mubr.f32.gmra.mrb[0].mxu0 %v544
        %v980 = vpop.f32.mrb[0].mxu0
        %v981 = vadd.f32 0.0, %v980
        %v982 = vpop.f32.mrb[0].mxu0
        %983 = vdwg.mxu0
        %984 = vmatprep.subr.mxu0 0.0
        %985 = vmatpush1.msra.mxu0 %v895
        %986 = vmatprep.subr.mxu0 0.0
        %987 = vmatpush1.msra.mxu0 %v896
        %988 = vmatprep.subr.mxu0 0.0
        %989 = vmatpush1.msra.mxu0 %v897
        %990 = vmatprep.subr.mxu0 0.0
        %991 = vmatpush1.msra.mxu0 %v898
        %992 = vmatprep.subr.mxu0 0.0
        %993 = vmatpush1.msra.mxu0 0.0
        %994 = vmatprep.subr.mxu0 0.0
        %995 = vmatpush1.msra.mxu0 0.0
        %996 = vmatprep.subr.mxu0 0.0
        %997 = vmatpush1.msra.mxu0 0.0
        %998 = vmatprep.subr.mxu0 0.0
        %999 = vmatpush1.msra.mxu0 0.0
        %1000 = vmatprep.subr.mxu0 0.0
        %1001 = vmatpush1.msra.mxu0 0.0
        %1002 = vmatprep.subr.mxu0 0.0
        %1003 = vmatpush1.msra.mxu0 0.0
        %1004 = vmatprep.subr.mxu0 0.0
        %1005 = vmatpush1.msra.mxu0 0.0
        %1006 = vmatprep.subr.mxu0 0.0
        %1007 = vmatpush1.msra.mxu0 0.0
        %1008 = vmatprep.subr.mxu0 0.0
        %1009 = vmatpush1.msra.mxu0 0.0
        %1010 = vmatprep.subr.mxu0 0.0
        %1011 = vmatpush1.msra.mxu0 0.0
        %1012 = vmatprep.subr.mxu0 0.0
        %1013 = vmatpush1.msra.mxu0 0.0
        %1014 = vmatprep.subr.mxu0 0.0
        %1015 = vmatpush1.msra.mxu0 0.0
        %1016 = vmatprep.subr.mxu0 0.0
        %1017 = vmatpush1.msra.mxu0 0.0
        %1018 = vmatprep.subr.mxu0 0.0
        %1019 = vmatpush1.msra.mxu0 0.0
        %1020 = vmatprep.subr.mxu0 0.0
        %1021 = vmatpush1.msra.mxu0 0.0
        %1022 = vmatprep.subr.mxu0 0.0
        %1023 = vmatpush1.msra.mxu0 0.0
        %1024 = vmatprep.subr.mxu0 0.0
        %1025 = vmatpush1.msra.mxu0 0.0
        %1026 = vmatprep.subr.mxu0 0.0
        %1027 = vmatpush1.msra.mxu0 0.0
        %1028 = vmatprep.subr.mxu0 0.0
        %1029 = vmatpush1.msra.mxu0 0.0
        %1030 = vmatprep.subr.mxu0 0.0
        %1031 = vmatpush1.msra.mxu0 0.0
        %1032 = vmatprep.subr.mxu0 0.0
        %1033 = vmatpush1.msra.mxu0 0.0
        %1034 = vmatprep.subr.mxu0 0.0
        %1035 = vmatpush1.msra.mxu0 0.0
        %1036 = vmatprep.subr.mxu0 0.0
        %1037 = vmatpush1.msra.mxu0 0.0
        %1038 = vmatprep.subr.mxu0 0.0
        %1039 = vmatpush1.msra.mxu0 0.0
        %1040 = vmatprep.subr.mxu0 0.0
        %1041 = vmatpush1.msra.mxu0 0.0
        %1042 = vmatprep.subr.mxu0 0.0
        %1043 = vmatpush1.msra.mxu0 0.0
        %1044 = vmatprep.subr.mxu0 0.0
        %1045 = vmatpush1.msra.mxu0 0.0
        %1046 = vmatprep.subr.mxu0 0.0
        %1047 = vmatpush1.msra.mxu0 0.0
        %1048 = vmatprep.mubr.f32.mxu0 0.0
        %1049 = vmatmul.mubr.f32.gmra.mrb[0].mxu0 %v632
        %v1050 = vpop.f32.mrb[0].mxu0
        %v1051 = vadd.f32 0.0, %v1050
        %v1052 = vpop.f32.mrb[0].mxu0
        %1053 = vmatprep.mubr.f32.mxu0 0.0
        %1054 = vmatmul.mubr.f32.gmra.mrb[0].mxu0 %v635
        %v1055 = vpop.f32.mrb[0].mxu0
        %v1056 = vadd.f32 0.0, %v1055
        %v1057 = vpop.f32.mrb[0].mxu0
        %1058 = vmatprep.mubr.f32.mxu0 0.0
        %1059 = vmatmul.mubr.f32.gmra.mrb[0].mxu0 %v638
        %v1060 = vpop.f32.mrb[0].mxu0
        %v1061 = vadd.f32 0.0, %v1060
        %v1062 = vpop.f32.mrb[0].mxu0
        %1063 = vmatprep.mubr.f32.mxu0 0.0
        %1064 = vmatmul.mubr.f32.gmra.mrb[0].mxu0 %v641
        %v1065 = vpop.f32.mrb[0].mxu0
        %v1066 = vadd.f32 0.0, %v1065
        %v1067 = vpop.f32.mrb[0].mxu0
        %1068 = vdwg.mxu0
        %v1069 = vmul.f32 %v373, %v966
        %v1070 = vmul.f32 %v374, %v971
        %v1071 = vmul.f32 %v375, %v976
        %v1072 = vmul.f32 %v376, %v981
        %v1073 = vmul.f32 %v377, %v1051
        %v1074 = vmul.f32 %v378, %v1056
        %v1075 = vmul.f32 %v379, %v1061
        %v1076 = vmul.f32 %v380, %v1066
        %v1077 = vld [vmem:[%s6] sm:$0x1]
        %v1079 = vlaneseq
        %v1080 = vshrl.u32 %v1079, 7
        %v1081 = vsub.s32 0, %v1080
        %v1082 = vrot.slane %v1077, %v1081
        %v1084 = vadd.f32 %v1069, %v1082
        %v1085 = vadd.f32 %v1070, %v1082
        %v1086 = vadd.f32 %v1071, %v1082
        %v1087 = vadd.f32 %v1072, %v1082
        %v1088 = vadd.f32 %v1073, %v1082
        %v1089 = vadd.f32 %v1074, %v1082
        %v1090 = vadd.f32 %v1075, %v1082
        %v1091 = vadd.f32 %v1076, %v1082
        %1092 = vst [vmem:[%s292] sm:$0xff] %v1084
        %1093 = vst [vmem:[%s292 + $0x8] sm:$0xff] %v1085
        %1094 = vst [vmem:[%s292 + $0x10] sm:$0xff] %v1086
        %1095 = vst [vmem:[%s292 + $0x18] sm:$0xff] %v1087
        %1096 = vst [vmem:[%s292 + $0x20] sm:$0xff] %v1088
        %1097 = vst [vmem:[%s292 + $0x28] sm:$0xff] %v1089
        %1098 = vst [vmem:[%s292 + $0x30] sm:$0xff] %v1090
        %1099 = vst [vmem:[%s292 + $0x38] sm:$0xff] %v1091
        %s1100 = sand.u32 %s186, 1
        %s1101 = scalar_lea.sflag [#allocation3], %s1100
        %s1102 = sand.u32 %s186, 1
        %s1103 = smul.addr %s1102, 64
        %s1104 = scalar_lea.vmem [#allocation2], %s1103
        // Predicated region
        $region49: #{tpu_custom_call.1} parent=47 // pred_check
          %p1105 = pneg %p196
        $region50: #{tpu_custom_call.1} parent=47 // pred_check_branch
          %1107 = sbr.rel (%p1105) target = $region52
        $region51: #{tpu_custom_call.1} parent=47 // pred_region
          %s1108 = smul.u32 2, %s21
          %s1110 = ssub.s32 1024, 1024
          %1111 = vsyncadd %s1101, %s1110
          %s1112 = smul.addr %s1108, 4
          %s1113 = smul.addr %s1112, 128
          %s1114 = scalar_lea.hbm %s7, %s1113
          %s1115 = sshll.u32 %s1104, 4
          %s1116 = int_to_ptr.vmem [resolvable:$true] %s1115
          %1121 = dma.vmem_to_hbm [thread:$0]  %s1116, 1024, %s1114, %s1101, 128, 128, 8
        $region52: #{tpu_custom_call.1} parent=47 // pred_fallthru
          _
      $region48: #{tpu_custom_call.1} parent=5 // pred_fallthru
        _
      %p1122 = scmp.le.s32.totalorder 2, %s16
      // Predicated region
      $region53: #{tpu_custom_call.1} parent=5 // pred_check
        %p1123 = pneg %p1122
      $region54: #{tpu_custom_call.1} parent=5 // pred_check_branch
        %1125 = sbr.rel (%p1123) target = $region56
      $region55: #{tpu_custom_call.1} parent=5 // pred_region
        %s1126 = ssub.s32 %s16, 2
        // Predicated region
        $region57: #{tpu_custom_call.1} parent=55 // pred_check
          %p1127 = pneg %p202
        $region58: #{tpu_custom_call.1} parent=55 // pred_check_branch
          %1129 = sbr.rel (%p1127) target = $region60
        $region59: #{tpu_custom_call.1} parent=55 // pred_region
          %s1130 = sand.u32 %s187, 1
          %s1131 = scalar_lea.sflag [#allocation3], %s1130
          %s1132 = sand.u32 %s187, 1
          %s1133 = smul.addr %s1132, 64
          %s1134 = scalar_lea.vmem [#allocation2], %s1133
          %1135 = dma.done %s1131, 1024
        $region60: #{tpu_custom_call.1} parent=55 // pred_fallthru
          _
      $region56: #{tpu_custom_call.1} parent=5 // pred_fallthru
        _
    $region6: #{tpu_custom_call.1} parent=1 // loop_footer
      %s20 = sadd.s32 1, %s16
    $region7: #{tpu_custom_call.1} parent=1 // loop_footer_branch
      %15 = sbr.rel target = $region3
    $region8: #{tpu_custom_call.1} parent=1 // loop_exit
      _
    %1136 = vsyncpa [#allocation3], 1
    %s1137 = scalar_lea.sflag [#allocation3], 1
    %1138 = vsyncpa %s1137, 1

</llo_original>
